<compile_context>
chip_gen: v6e
topology: v6e:2x2x1
jax: 0.10.0
libtpu: 0.0.40
codegen_flags: <defaults>
</compile_context>

<pallas_src>
import math

import jax
import jax.numpy as jnp
from jax.experimental import pallas as pl
from jax.experimental.pallas import tpu as pltpu

LANE = 128   # lane-dense compute width for the hidden layers
IN_DIM = 4   # real input features  (layer[0])
OUT_DIM = 3  # real output features (layer[3])


def mlp_kernel(x_ref, w1_ref, b1_ref, w2_ref, b2_ref, w3_ref, b3_ref,
               o_ref, xpad_ref):
    """One batch tile of the full 3-layer MLP forward pass.

    x_ref is the narrow (TB, 4) input block; it is zero-padded into a
    lane-dense (TB, 128) VMEM scratch so every matmul is (TB,128)x(128,128).
    Only the first 3 output lanes are written back.
    """
    # Re-zero the scratch every step (cheap VMEM stores) so the padded lanes
    # are always valid, even if the batch grid axis is split across cores.
    xpad_ref[...] = jnp.zeros_like(xpad_ref)
    xpad_ref[:, :IN_DIM] = x_ref[...]

    h1 = jax.nn.sigmoid(
        jnp.dot(xpad_ref[...], w1_ref[...], preferred_element_type=jnp.float32)
        + b1_ref[...]
    )
    h2 = jax.nn.sigmoid(
        jnp.dot(h1, w2_ref[...], preferred_element_type=jnp.float32)
        + b2_ref[...]
    )
    out = (
        jnp.dot(h2, w3_ref[...], preferred_element_type=jnp.float32)
        + b3_ref[...]
    )
    o_ref[...] = out[:, :OUT_DIM].astype(o_ref.dtype)


def _round_up(n, m):
    return ((n + m - 1) // m) * m


def _pad_to(a, shape):
    return jnp.pad(a, [(0, s - d) for d, s in zip(a.shape, shape)])


def dnn_forward(x, params, tile_b=1024):
    """Runs the batch-tiled Pallas kernel. x: (B, 4) -> (B, 3)."""
    w1, b1, w2, b2, w3, b3 = params
    B, in_dim = x.shape
    assert in_dim == IN_DIM and w3.shape[1] == OUT_DIM
    F = LANE

    # Resident weights/biases: padded once to lane-dense layouts (tiny; held in
    # VMEM across all grid steps via constant index_maps).
    w1p, b1p = _pad_to(w1, (F, F)), _pad_to(b1, (1, F))
    w2p, b2p = _pad_to(w2, (F, F)), _pad_to(b2, (1, F))
    w3p, b3p = _pad_to(w3, (F, F)), _pad_to(b3, (1, F))

    # Batch tiling only: tile of up to `tile_b` rows (multiple of 8 sublanes);
    # pad the batch (rows only) so the grid divides evenly.
    TB = min(tile_b, _round_up(B, 8))
    B_pad = _round_up(B, TB)
    xp = x if B_pad == B else _pad_to(x, (B_pad, IN_DIM))
    n_tiles = B_pad // TB

    # x / out keep their natural 4 / 3 lane widths (full-last-dim blocks) so
    # the kernel only streams the real data from/to HBM.
    x_spec = pl.BlockSpec((TB, IN_DIM), lambda i: (i, 0))
    w_spec = pl.BlockSpec((F, F), lambda i: (0, 0))   # resident across steps
    b_spec = pl.BlockSpec((1, F), lambda i: (0, 0))   # resident across steps
    o_spec = pl.BlockSpec((TB, OUT_DIM), lambda i: (i, 0))

    out = pl.pallas_call(
        mlp_kernel,
        out_shape=jax.ShapeDtypeStruct((B_pad, OUT_DIM), jnp.float32),
        grid=(n_tiles,),
        in_specs=[x_spec, w_spec, b_spec, w_spec, b_spec, w_spec, b_spec],
        out_specs=o_spec,
        scratch_shapes=[pltpu.VMEM((TB, F), jnp.float32)],
        compiler_params=pltpu.CompilerParams(
            dimension_semantics=("parallel",),
        ),
    )(xp, w1p, b1p, w2p, b2p, w3p, b3p)

    return out[:B]


def init_params(key, layer=(4, 10, 20, 3)):
    """Xavier-uniform weights, zero biases — matches DNN_PYTORCH.__init__
    (nn.init.xavier_uniform_ on weights, bias zeroed)."""
    params = []
    keys = jax.random.split(key, len(layer) - 1)
    for k, fan_in, fan_out in zip(keys, layer[:-1], layer[1:]):
        bound = math.sqrt(6.0 / (fan_in + fan_out))
        # PyTorch weight is (out, in); we store the transpose (in, out).
        w = jax.random.uniform(
            k, (fan_in, fan_out), minval=-bound, maxval=bound, dtype=jnp.float32
        )
        b = jnp.zeros((1, fan_out), dtype=jnp.float32)
        params += [w, b]
    return tuple(params)


def reference_forward(x, params):
    w1, b1, w2, b2, w3, b3 = params
    h1 = jax.nn.sigmoid(x @ w1 + b1)
    h2 = jax.nn.sigmoid(h1 @ w2 + b2)
    return h2 @ w3 + b3


if __name__ == "__main__":
    key = jax.random.PRNGKey(0)
    pkey, xkey = jax.random.split(key)

    layer = (4, 10, 20, 3)
    params = init_params(pkey, layer)

    batch = 8
    x = jax.random.normal(xkey, (batch, layer[0]), dtype=jnp.float32)

    out = dnn_forward(x, params)
    out = jax.block_until_ready(out)

    ref = reference_forward(x, params)
    assert out.shape == (batch, layer[-1])
    assert jnp.allclose(out, ref, atol=1e-5, rtol=1e-5)

    print("KERNEL_OK")
</pallas_src>

<mosaic_0001>
module attributes {stable_mosaic.version = 11 : i64} {
  func.func @mlp_kernel(%arg0: i32, %arg1: memref<8x4xf32, #tpu.memory_space<vmem>>, %arg2: memref<128x128xf32, #tpu.memory_space<vmem>>, %arg3: memref<1x128xf32, #tpu.memory_space<vmem>>, %arg4: memref<128x128xf32, #tpu.memory_space<vmem>>, %arg5: memref<1x128xf32, #tpu.memory_space<vmem>>, %arg6: memref<128x128xf32, #tpu.memory_space<vmem>>, %arg7: memref<1x128xf32, #tpu.memory_space<vmem>>, %arg8: memref<8x3xf32, #tpu.memory_space<vmem>>, %arg9: memref<8x128xf32, #tpu.memory_space<vmem>>) attributes {dimension_semantics = [#tpu.dimension_semantics<parallel>], iteration_bounds = array<i64: 1>, scalar_prefetch = 0 : i64, scratch_operands = 1 : i64, tpu.core_type = #tpu.core_type<tc>, window_params = [{transform_indices = @transform_0, window_bounds = array<i64: 8, 4>}, {pipeline_mode = #tpu.pipeline_mode<synchronous>, transform_indices = @transform_1, window_bounds = array<i64: 128, 128>}, {pipeline_mode = #tpu.pipeline_mode<synchronous>, transform_indices = @transform_2, window_bounds = array<i64: 1, 128>}, {pipeline_mode = #tpu.pipeline_mode<synchronous>, transform_indices = @transform_3, window_bounds = array<i64: 128, 128>}, {pipeline_mode = #tpu.pipeline_mode<synchronous>, transform_indices = @transform_4, window_bounds = array<i64: 1, 128>}, {pipeline_mode = #tpu.pipeline_mode<synchronous>, transform_indices = @transform_5, window_bounds = array<i64: 128, 128>}, {pipeline_mode = #tpu.pipeline_mode<synchronous>, transform_indices = @transform_6, window_bounds = array<i64: 1, 128>}, {transform_indices = @transform_7, window_bounds = array<i64: 8, 3>}]} {
    %cst = arith.constant 0.000000e+00 : f32
    %0 = vector.broadcast %cst : f32 to vector<8x128xf32>
    %c0 = arith.constant 0 : index
    %c0_0 = arith.constant 0 : index
    %1 = vector.load %arg9[%c0, %c0_0] : memref<8x128xf32, #tpu.memory_space<vmem>>, vector<8x128xf32>
    tpu.vector_store %arg9[%c0, %c0_0], %0 {strides = array<i32>} : memref<8x128xf32, #tpu.memory_space<vmem>>, vector<8x128xf32>,
    %c0_1 = arith.constant 0 : index
    %c0_2 = arith.constant 0 : index
    %2 = vector.load %arg1[%c0_1, %c0_2] : memref<8x4xf32, #tpu.memory_space<vmem>>, vector<8x4xf32>
    %c0_3 = arith.constant 0 : index
    %c0_4 = arith.constant 0 : index
    %3 = vector.load %arg9[%c0_3, %c0_4] : memref<8x128xf32, #tpu.memory_space<vmem>>, vector<8x4xf32>
    tpu.vector_store %arg9[%c0_3, %c0_4], %2 {strides = array<i32>} : memref<8x128xf32, #tpu.memory_space<vmem>>, vector<8x4xf32>,
    %c0_5 = arith.constant 0 : index
    %c0_6 = arith.constant 0 : index
    %4 = vector.load %arg9[%c0_5, %c0_6] : memref<8x128xf32, #tpu.memory_space<vmem>>, vector<8x128xf32>
    %c0_7 = arith.constant 0 : index
    %c0_8 = arith.constant 0 : index
    %5 = vector.load %arg2[%c0_7, %c0_8] : memref<128x128xf32, #tpu.memory_space<vmem>>, vector<128x128xf32>
    %cst_9 = arith.constant dense<0.000000e+00> : vector<8x128xf32>
    %6 = tpu.matmul %4, %5, %cst_9 {dimension_numbers = #tpu.dot_dimension_numbers<[1], [0], [0], [1], [0, 0, 1, 1], [], []>} : vector<8x128xf32>, vector<128x128xf32>, vector<8x128xf32> -> vector<8x128xf32>
    %c0_10 = arith.constant 0 : index
    %c0_11 = arith.constant 0 : index
    %7 = vector.load %arg3[%c0_10, %c0_11] : memref<1x128xf32, #tpu.memory_space<vmem>>, vector<1x128xf32>
    %8 = vector.broadcast %7 : vector<1x128xf32> to vector<8x128xf32>
    %9 = arith.addf %6, %8 : vector<8x128xf32>
    %10 = arith.negf %9 : vector<8x128xf32>
    %11 = math.exp %10 : vector<8x128xf32>
    %cst_12 = arith.constant 1.000000e+00 : f32
    %12 = vector.broadcast %cst_12 : f32 to vector<8x128xf32>
    %13 = arith.addf %12, %11 : vector<8x128xf32>
    %14 = arith.divf %12, %13 : vector<8x128xf32>
    %c0_13 = arith.constant 0 : index
    %c0_14 = arith.constant 0 : index
    %15 = vector.load %arg4[%c0_13, %c0_14] : memref<128x128xf32, #tpu.memory_space<vmem>>, vector<128x128xf32>
    %cst_15 = arith.constant dense<0.000000e+00> : vector<8x128xf32>
    %16 = tpu.matmul %14, %15, %cst_15 {dimension_numbers = #tpu.dot_dimension_numbers<[1], [0], [0], [1], [0, 0, 1, 1], [], []>} : vector<8x128xf32>, vector<128x128xf32>, vector<8x128xf32> -> vector<8x128xf32>
    %c0_16 = arith.constant 0 : index
    %c0_17 = arith.constant 0 : index
    %17 = vector.load %arg5[%c0_16, %c0_17] : memref<1x128xf32, #tpu.memory_space<vmem>>, vector<1x128xf32>
    %18 = vector.broadcast %17 : vector<1x128xf32> to vector<8x128xf32>
    %19 = arith.addf %16, %18 : vector<8x128xf32>
    %20 = arith.negf %19 : vector<8x128xf32>
    %21 = math.exp %20 : vector<8x128xf32>
    %cst_18 = arith.constant 1.000000e+00 : f32
    %22 = vector.broadcast %cst_18 : f32 to vector<8x128xf32>
    %23 = arith.addf %22, %21 : vector<8x128xf32>
    %24 = arith.divf %22, %23 : vector<8x128xf32>
    %c0_19 = arith.constant 0 : index
    %c0_20 = arith.constant 0 : index
    %25 = vector.load %arg6[%c0_19, %c0_20] : memref<128x128xf32, #tpu.memory_space<vmem>>, vector<128x128xf32>
    %cst_21 = arith.constant dense<0.000000e+00> : vector<8x128xf32>
    %26 = tpu.matmul %24, %25, %cst_21 {dimension_numbers = #tpu.dot_dimension_numbers<[1], [0], [0], [1], [0, 0, 1, 1], [], []>} : vector<8x128xf32>, vector<128x128xf32>, vector<8x128xf32> -> vector<8x128xf32>
    %c0_22 = arith.constant 0 : index
    %c0_23 = arith.constant 0 : index
    %27 = vector.load %arg7[%c0_22, %c0_23] : memref<1x128xf32, #tpu.memory_space<vmem>>, vector<1x128xf32>
    %28 = vector.broadcast %27 : vector<1x128xf32> to vector<8x128xf32>
    %29 = arith.addf %26, %28 : vector<8x128xf32>
    %30 = vector.extract_strided_slice %29 {offsets = [0, 0], sizes = [8, 3], strides = [1, 1]} : vector<8x128xf32> to vector<8x3xf32>
    %c0_24 = arith.constant 0 : index
    %c0_25 = arith.constant 0 : index
    %31 = vector.load %arg8[%c0_24, %c0_25] : memref<8x3xf32, #tpu.memory_space<vmem>>, vector<8x3xf32>
    tpu.vector_store %arg8[%c0_24, %c0_25], %30 {strides = array<i32>} : memref<8x3xf32, #tpu.memory_space<vmem>>, vector<8x3xf32>,
    return
  }
  func.func @transform_0(%arg0: i32) -> (i32, i32) {
    %c0_i32 = arith.constant 0 : i32
    %c0_i32_0 = arith.constant 0 : i32
    return %arg0, %c0_i32 : i32, i32
  }
  func.func @transform_1(%arg0: i32) -> (i32, i32) {
    %c0_i32 = arith.constant 0 : i32
    %c0_i32_0 = arith.constant 0 : i32
    %c0_i32_1 = arith.constant 0 : i32
    return %c0_i32, %c0_i32_0 : i32, i32
  }
  func.func @transform_2(%arg0: i32) -> (i32, i32) {
    %c0_i32 = arith.constant 0 : i32
    %c0_i32_0 = arith.constant 0 : i32
    %c0_i32_1 = arith.constant 0 : i32
    return %c0_i32, %c0_i32_0 : i32, i32
  }
  func.func @transform_3(%arg0: i32) -> (i32, i32) {
    %c0_i32 = arith.constant 0 : i32
    %c0_i32_0 = arith.constant 0 : i32
    %c0_i32_1 = arith.constant 0 : i32
    return %c0_i32, %c0_i32_0 : i32, i32
  }
  func.func @transform_4(%arg0: i32) -> (i32, i32) {
    %c0_i32 = arith.constant 0 : i32
    %c0_i32_0 = arith.constant 0 : i32
    %c0_i32_1 = arith.constant 0 : i32
    return %c0_i32, %c0_i32_0 : i32, i32
  }
  func.func @transform_5(%arg0: i32) -> (i32, i32) {
    %c0_i32 = arith.constant 0 : i32
    %c0_i32_0 = arith.constant 0 : i32
    %c0_i32_1 = arith.constant 0 : i32
    return %c0_i32, %c0_i32_0 : i32, i32
  }
  func.func @transform_6(%arg0: i32) -> (i32, i32) {
    %c0_i32 = arith.constant 0 : i32
    %c0_i32_0 = arith.constant 0 : i32
    %c0_i32_1 = arith.constant 0 : i32
    return %c0_i32, %c0_i32_0 : i32, i32
  }
  func.func @transform_7(%arg0: i32) -> (i32, i32) {
    %c0_i32 = arith.constant 0 : i32
    %c0_i32_0 = arith.constant 0 : i32
    return %arg0, %c0_i32 : i32, i32
  }
}

</mosaic_0001>

<llo_original>
// kernel: tpu_custom_call.1
$region0: #{tpu_custom_call.1}
  #allocation0 [shape = 'u32[]', space=smem, size = 0x4, offset = 0x4, fixed_abs, tag = 'smem constant byte address 0x4 - core index']
  #allocation1 [shape = 'u32[144,128]{1,0:T(1,128)}', space=vmem, size = 0x12000, scoped, tag = 'internal scratch']
  #allocation2 [shape = 'f32[8,128]{1,0:T(8,128)}', space=vmem, size = 0x1000, scoped, tag = 'scratch operand']
  %s0 = inlined_call_operand.vmem [shape: f32[8,4], index: 0, kind: input, shape index: {}]
  %s1 = inlined_call_operand.hbm [shape: f32[128,128], index: 1, kind: input, shape index: {}]
  %s2 = inlined_call_operand.vmem [shape: f32[1,128], index: 2, kind: input, shape index: {}]
  %s3 = inlined_call_operand.hbm [shape: f32[128,128], index: 3, kind: input, shape index: {}]
  %s4 = inlined_call_operand.vmem [shape: f32[1,128], index: 4, kind: input, shape index: {}]
  %s5 = inlined_call_operand.hbm [shape: f32[128,128], index: 5, kind: input, shape index: {}]
  %s6 = inlined_call_operand.vmem [shape: f32[1,128], index: 6, kind: input, shape index: {}]
  %s7 = inlined_call_operand.vmem [shape: f32[8,3], index: 7, kind: output, shape index: {}]
  %s8 = sld [smem:[#allocation0]]
  $region50: #{tpu_custom_call.1} parent=0
    _
  %s10 = ssub.s32 1, %s8
  %s11 = scalar_select 0, %s10, %s8
  $region1: #{tpu_custom_call.1} parent=0
    #allocation3 [shape = 'u8[65536]{0}', space=vmem, size = 0x10000, scoped, tag = 'input window, operand 1, single buffered']
    #allocation4 [shape = 's32[1]{0}', space=sflag, size = 0x4, scoped, tag = 'scoped memory for tpu_custom_call.1']
    #allocation5 [shape = 'u8[65536]{0}', space=vmem, size = 0x10000, scoped, tag = 'input window, operand 3, single buffered']
    #allocation6 [shape = 's32[1]{0}', space=sflag, size = 0x4, scoped, tag = 'scoped memory for tpu_custom_call.1']
    #allocation7 [shape = 'u8[65536]{0}', space=vmem, size = 0x10000, scoped, tag = 'input window, operand 5, single buffered']
    %12 = vsyncpa [#allocation4], 0
    %13 = vsyncpa [#allocation6], 0
    // Predicated region
    $region2: #{tpu_custom_call.1} parent=1 // pred_check
      _
    $region3: #{tpu_custom_call.1} parent=1 // pred_check_branch
      %15 = sbr.rel (0) target = $region5
    $region4: #{tpu_custom_call.1} parent=1 // pred_region
      _
    $region5: #{tpu_custom_call.1} parent=1 // pred_fallthru
      _
    // Predicated region
    $region6: #{tpu_custom_call.1} parent=1 // pred_check
      _
    $region7: #{tpu_custom_call.1} parent=1 // pred_check_branch
      %17 = sbr.rel (0) target = $region9
    $region8: #{tpu_custom_call.1} parent=1 // pred_region
      %s19 = ssub.s32 2048, 2048
      %20 = vsyncadd [#allocation4], %s19
      %s21 = sshll.u32 [#allocation3], 4
      %s22 = int_to_ptr.vmem [resolvable:$true] %s21
      %27 = dma.hbm_to_vmem [thread:$0]  %s1, 2048, %s22, [#allocation4], 128, 128, 8
    $region9: #{tpu_custom_call.1} parent=1 // pred_fallthru
      _
    // Predicated region
    $region10: #{tpu_custom_call.1} parent=1 // pred_check
      _
    $region11: #{tpu_custom_call.1} parent=1 // pred_check_branch
      %29 = sbr.rel (0) target = $region13
    $region12: #{tpu_custom_call.1} parent=1 // pred_region
      _
    $region13: #{tpu_custom_call.1} parent=1 // pred_fallthru
      _
    // Predicated region
    $region14: #{tpu_custom_call.1} parent=1 // pred_check
      _
    $region15: #{tpu_custom_call.1} parent=1 // pred_check_branch
      %31 = sbr.rel (0) target = $region17
    $region16: #{tpu_custom_call.1} parent=1 // pred_region
      %s33 = ssub.s32 2048, 2048
      %34 = vsyncadd [#allocation6], %s33
      %s35 = sshll.u32 [#allocation5], 4
      %s36 = int_to_ptr.vmem [resolvable:$true] %s35
      %41 = dma.hbm_to_vmem [thread:$0]  %s3, 2048, %s36, [#allocation6], 128, 128, 8
    $region17: #{tpu_custom_call.1} parent=1 // pred_fallthru
      _
    // Predicated region
    $region18: #{tpu_custom_call.1} parent=1 // pred_check
      _
    $region19: #{tpu_custom_call.1} parent=1 // pred_check_branch
      %43 = sbr.rel (0) target = $region21
    $region20: #{tpu_custom_call.1} parent=1 // pred_region
      _
    $region21: #{tpu_custom_call.1} parent=1 // pred_fallthru
      _
    // Predicated region
    $region22: #{tpu_custom_call.1} parent=1 // pred_check
      _
    $region23: #{tpu_custom_call.1} parent=1 // pred_check_branch
      %45 = sbr.rel (0) target = $region25
    $region24: #{tpu_custom_call.1} parent=1 // pred_region
      %s47 = ssub.s32 2048, 2048
      %48 = vsyncadd [#allocation6], %s47
      %s49 = sshll.u32 [#allocation7], 4
      %s50 = int_to_ptr.vmem [resolvable:$true] %s49
      %55 = dma.hbm_to_vmem [thread:$0]  %s5, 2048, %s50, [#allocation6], 128, 128, 8
    $region25: #{tpu_custom_call.1} parent=1 // pred_fallthru
      _
    // Predicated region
    $region26: #{tpu_custom_call.1} parent=1 // pred_check
      _
    $region27: #{tpu_custom_call.1} parent=1 // pred_check_branch
      %57 = sbr.rel (0) target = $region29
    $region28: #{tpu_custom_call.1} parent=1 // pred_region
      _
    $region29: #{tpu_custom_call.1} parent=1 // pred_fallthru
      _
    // Predicated region
    $region30: #{tpu_custom_call.1} parent=1 // pred_check
      _
    $region31: #{tpu_custom_call.1} parent=1 // pred_check_branch
      %59 = sbr.rel (0) target = $region33
    $region32: #{tpu_custom_call.1} parent=1 // pred_region
      %60 = dma.done [#allocation4], 2048
    $region33: #{tpu_custom_call.1} parent=1 // pred_fallthru
      _
    // Predicated region
    $region34: #{tpu_custom_call.1} parent=1 // pred_check
      _
    $region35: #{tpu_custom_call.1} parent=1 // pred_check_branch
      %62 = sbr.rel (0) target = $region37
    $region36: #{tpu_custom_call.1} parent=1 // pred_region
      %63 = dma.done [#allocation6], 2048
    $region37: #{tpu_custom_call.1} parent=1 // pred_fallthru
      _
    // Predicated region
    $region38: #{tpu_custom_call.1} parent=1 // pred_check
      _
    $region39: #{tpu_custom_call.1} parent=1 // pred_check_branch
      %65 = sbr.rel (0) target = $region41
    $region40: #{tpu_custom_call.1} parent=1 // pred_region
      %66 = dma.done [#allocation6], 2048
    $region41: #{tpu_custom_call.1} parent=1 // pred_fallthru
      _
    %67 = vst [vmem:[#allocation2] sm:$0xff] 0.0
    %v68 = vld [vmem:[%s0] sm:$0xff]
    %vm69 = vcmask 31744
    %70 = vst.msk [vmem:[#allocation2] sm:$0xff] %vm69, %v68
    %v71 = vld [vmem:[#allocation2] sm:$0xff]
    %v72 = vld [vmem:[#allocation3] sm:$0xff]
    %v73 = vld [vmem:[#allocation3 + $0x8] sm:$0xff]
    %v74 = vld [vmem:[#allocation3 + $0x10] sm:$0xff]
    %v75 = vld [vmem:[#allocation3 + $0x18] sm:$0xff]
    %v76 = vld [vmem:[#allocation3 + $0x20] sm:$0xff]
    %v77 = vld [vmem:[#allocation3 + $0x28] sm:$0xff]
    %v78 = vld [vmem:[#allocation3 + $0x30] sm:$0xff]
    %v79 = vld [vmem:[#allocation3 + $0x38] sm:$0xff]
    %v80 = vld [vmem:[#allocation3 + $0x40] sm:$0xff]
    %v81 = vld [vmem:[#allocation3 + $0x48] sm:$0xff]
    %v82 = vld [vmem:[#allocation3 + $0x50] sm:$0xff]
    %v83 = vld [vmem:[#allocation3 + $0x58] sm:$0xff]
    %v84 = vld [vmem:[#allocation3 + $0x60] sm:$0xff]
    %v85 = vld [vmem:[#allocation3 + $0x68] sm:$0xff]
    %v86 = vld [vmem:[#allocation3 + $0x70] sm:$0xff]
    %v87 = vld [vmem:[#allocation3 + $0x78] sm:$0xff]
    %v88 = vld [vmem:[%s2] sm:$0x1]
    %v90 = vlaneseq
    %v91 = vshrl.u32 %v90, 7
    %v92 = vsub.s32 0, %v91
    %v93 = vrot.slane %v88, %v92
    %95 = vmatprep.subr.mxu0 0.0
    %96 = vmatpush1.msra.mxu0 %v87
    %97 = vmatprep.subr.mxu0 0.0
    %98 = vmatpush1.msra.mxu0 %v86
    %99 = vmatprep.subr.mxu0 0.0
    %100 = vmatpush1.msra.mxu0 %v85
    %101 = vmatprep.subr.mxu0 0.0
    %102 = vmatpush1.msra.mxu0 %v84
    %103 = vmatprep.subr.mxu0 0.0
    %104 = vmatpush1.msra.mxu0 %v83
    %105 = vmatprep.subr.mxu0 0.0
    %106 = vmatpush1.msra.mxu0 %v82
    %107 = vmatprep.subr.mxu0 0.0
    %108 = vmatpush1.msra.mxu0 %v81
    %109 = vmatprep.subr.mxu0 0.0
    %110 = vmatpush1.msra.mxu0 %v80
    %111 = vmatprep.subr.mxu0 0.0
    %112 = vmatpush1.msra.mxu0 %v79
    %113 = vmatprep.subr.mxu0 0.0
    %114 = vmatpush1.msra.mxu0 %v78
    %115 = vmatprep.subr.mxu0 0.0
    %116 = vmatpush1.msra.mxu0 %v77
    %117 = vmatprep.subr.mxu0 0.0
    %118 = vmatpush1.msra.mxu0 %v76
    %119 = vmatprep.subr.mxu0 0.0
    %120 = vmatpush1.msra.mxu0 %v75
    %121 = vmatprep.subr.mxu0 0.0
    %122 = vmatpush1.msra.mxu0 %v74
    %123 = vmatprep.subr.mxu0 0.0
    %124 = vmatpush1.msra.mxu0 %v73
    %125 = vmatprep.subr.mxu0 0.0
    %126 = vmatpush1.msra.mxu0 %v72
    %127 = vmatprep.subr.mxu0 0.0
    %128 = vmatpush2.msra.mxu0 0.0
    %129 = vmatprep.subr.mxu0 0.0
    %130 = vmatpush2.msra.mxu0 0.0
    %131 = vmatprep.subr.mxu0 0.0
    %132 = vmatpush2.msra.mxu0 0.0
    %133 = vmatprep.subr.mxu0 0.0
    %134 = vmatpush2.msra.mxu0 0.0
    %135 = vmatprep.subr.mxu0 0.0
    %136 = vmatpush2.msra.mxu0 0.0
    %137 = vmatprep.subr.mxu0 0.0
    %138 = vmatpush2.msra.mxu0 0.0
    %139 = vmatprep.subr.mxu0 0.0
    %140 = vmatpush2.msra.mxu0 0.0
    %141 = vmatprep.subr.mxu0 0.0
    %142 = vmatpush2.msra.mxu0 0.0
    %143 = vmatprep.subr.mxu0 0.0
    %144 = vmatpush2.msra.mxu0 0.0
    %145 = vmatprep.subr.mxu0 0.0
    %146 = vmatpush2.msra.mxu0 0.0
    %147 = vmatprep.subr.mxu0 0.0
    %148 = vmatpush2.msra.mxu0 0.0
    %149 = vmatprep.subr.mxu0 0.0
    %150 = vmatpush2.msra.mxu0 0.0
    %151 = vmatprep.subr.mxu0 0.0
    %152 = vmatpush2.msra.mxu0 0.0
    %153 = vmatprep.subr.mxu0 0.0
    %154 = vmatpush2.msra.mxu0 0.0
    %155 = vmatprep.subr.mxu0 0.0
    %156 = vmatpush2.msra.mxu0 0.0
    %157 = vmatprep.subr.mxu0 0.0
    %158 = vmatpush2.msra.mxu0 0.0
    %159 = vmatprep.mubr.f32.mxu0 0.0
    %160 = vmatmul.mubr.f32.gmra.mxu0 %v71
    %v161 = vpop.f32.mrf.mxu0
    %v162 = vadd.f32 %v93, %v161
    %v163 = vpop.f32.mrf.mxu0
    %164 = vdwg.mxu0
    %v165 = vxor.u32 %v162, 2147483648
    %v166 = vmul.f32 %v165, 1.442695
    %v167 = vpow.pop %v166
    %v168 = vadd.f32 %v167, 1.0
    %v169 = vrcp.pop %v168
    %v170 = vmul.f32 1.0, %v169
    %v171 = vld [vmem:[#allocation5] sm:$0xff]
    %v172 = vld [vmem:[#allocation5 + $0x8] sm:$0xff]
    %v173 = vld [vmem:[#allocation5 + $0x10] sm:$0xff]
    %v174 = vld [vmem:[#allocation5 + $0x18] sm:$0xff]
    %v175 = vld [vmem:[#allocation5 + $0x20] sm:$0xff]
    %v176 = vld [vmem:[#allocation5 + $0x28] sm:$0xff]
    %v177 = vld [vmem:[#allocation5 + $0x30] sm:$0xff]
    %v178 = vld [vmem:[#allocation5 + $0x38] sm:$0xff]
    %v179 = vld [vmem:[#allocation5 + $0x40] sm:$0xff]
    %v180 = vld [vmem:[#allocation5 + $0x48] sm:$0xff]
    %v181 = vld [vmem:[#allocation5 + $0x50] sm:$0xff]
    %v182 = vld [vmem:[#allocation5 + $0x58] sm:$0xff]
    %v183 = vld [vmem:[#allocation5 + $0x60] sm:$0xff]
    %v184 = vld [vmem:[#allocation5 + $0x68] sm:$0xff]
    %v185 = vld [vmem:[#allocation5 + $0x70] sm:$0xff]
    %v186 = vld [vmem:[#allocation5 + $0x78] sm:$0xff]
    %v187 = vld [vmem:[%s4] sm:$0x1]
    %v189 = vlaneseq
    %v190 = vshrl.u32 %v189, 7
    %v191 = vsub.s32 0, %v190
    %v192 = vrot.slane %v187, %v191
    %194 = vmatprep.subr.mxu0 0.0
    %195 = vmatpush1.msra.mxu0 %v186
    %196 = vmatprep.subr.mxu0 0.0
    %197 = vmatpush1.msra.mxu0 %v185
    %198 = vmatprep.subr.mxu0 0.0
    %199 = vmatpush1.msra.mxu0 %v184
    %200 = vmatprep.subr.mxu0 0.0
    %201 = vmatpush1.msra.mxu0 %v183
    %202 = vmatprep.subr.mxu0 0.0
    %203 = vmatpush1.msra.mxu0 %v182
    %204 = vmatprep.subr.mxu0 0.0
    %205 = vmatpush1.msra.mxu0 %v181
    %206 = vmatprep.subr.mxu0 0.0
    %207 = vmatpush1.msra.mxu0 %v180
    %208 = vmatprep.subr.mxu0 0.0
    %209 = vmatpush1.msra.mxu0 %v179
    %210 = vmatprep.subr.mxu0 0.0
    %211 = vmatpush1.msra.mxu0 %v178
    %212 = vmatprep.subr.mxu0 0.0
    %213 = vmatpush1.msra.mxu0 %v177
    %214 = vmatprep.subr.mxu0 0.0
    %215 = vmatpush1.msra.mxu0 %v176
    %216 = vmatprep.subr.mxu0 0.0
    %217 = vmatpush1.msra.mxu0 %v175
    %218 = vmatprep.subr.mxu0 0.0
    %219 = vmatpush1.msra.mxu0 %v174
    %220 = vmatprep.subr.mxu0 0.0
    %221 = vmatpush1.msra.mxu0 %v173
    %222 = vmatprep.subr.mxu0 0.0
    %223 = vmatpush1.msra.mxu0 %v172
    %224 = vmatprep.subr.mxu0 0.0
    %225 = vmatpush1.msra.mxu0 %v171
    %226 = vmatprep.subr.mxu0 0.0
    %227 = vmatpush2.msra.mxu0 0.0
    %228 = vmatprep.subr.mxu0 0.0
    %229 = vmatpush2.msra.mxu0 0.0
    %230 = vmatprep.subr.mxu0 0.0
    %231 = vmatpush2.msra.mxu0 0.0
    %232 = vmatprep.subr.mxu0 0.0
    %233 = vmatpush2.msra.mxu0 0.0
    %234 = vmatprep.subr.mxu0 0.0
    %235 = vmatpush2.msra.mxu0 0.0
    %236 = vmatprep.subr.mxu0 0.0
    %237 = vmatpush2.msra.mxu0 0.0
    %238 = vmatprep.subr.mxu0 0.0
    %239 = vmatpush2.msra.mxu0 0.0
    %240 = vmatprep.subr.mxu0 0.0
    %241 = vmatpush2.msra.mxu0 0.0
    %242 = vmatprep.subr.mxu0 0.0
    %243 = vmatpush2.msra.mxu0 0.0
    %244 = vmatprep.subr.mxu0 0.0
    %245 = vmatpush2.msra.mxu0 0.0
    %246 = vmatprep.subr.mxu0 0.0
    %247 = vmatpush2.msra.mxu0 0.0
    %248 = vmatprep.subr.mxu0 0.0
    %249 = vmatpush2.msra.mxu0 0.0
    %250 = vmatprep.subr.mxu0 0.0
    %251 = vmatpush2.msra.mxu0 0.0
    %252 = vmatprep.subr.mxu0 0.0
    %253 = vmatpush2.msra.mxu0 0.0
    %254 = vmatprep.subr.mxu0 0.0
    %255 = vmatpush2.msra.mxu0 0.0
    %256 = vmatprep.subr.mxu0 0.0
    %257 = vmatpush2.msra.mxu0 0.0
    %258 = vmatprep.mubr.f32.mxu0 0.0
    %259 = vmatmul.mubr.f32.gmra.mxu0 %v170
    %v260 = vpop.f32.mrf.mxu0
    %v261 = vadd.f32 %v192, %v260
    %v262 = vpop.f32.mrf.mxu0
    %263 = vdwg.mxu0
    %v264 = vxor.u32 %v261, 2147483648
    %v265 = vmul.f32 %v264, 1.442695
    %v266 = vpow.pop %v265
    %v267 = vadd.f32 %v266, 1.0
    %v268 = vrcp.pop %v267
    %v269 = vmul.f32 1.0, %v268
    %v270 = vld [vmem:[#allocation7] sm:$0xff]
    %v271 = vld [vmem:[#allocation7 + $0x8] sm:$0xff]
    %v272 = vld [vmem:[#allocation7 + $0x10] sm:$0xff]
    %v273 = vld [vmem:[#allocation7 + $0x18] sm:$0xff]
    %v274 = vld [vmem:[#allocation7 + $0x20] sm:$0xff]
    %v275 = vld [vmem:[#allocation7 + $0x28] sm:$0xff]
    %v276 = vld [vmem:[#allocation7 + $0x30] sm:$0xff]
    %v277 = vld [vmem:[#allocation7 + $0x38] sm:$0xff]
    %v278 = vld [vmem:[#allocation7 + $0x40] sm:$0xff]
    %v279 = vld [vmem:[#allocation7 + $0x48] sm:$0xff]
    %v280 = vld [vmem:[#allocation7 + $0x50] sm:$0xff]
    %v281 = vld [vmem:[#allocation7 + $0x58] sm:$0xff]
    %v282 = vld [vmem:[#allocation7 + $0x60] sm:$0xff]
    %v283 = vld [vmem:[#allocation7 + $0x68] sm:$0xff]
    %v284 = vld [vmem:[#allocation7 + $0x70] sm:$0xff]
    %v285 = vld [vmem:[#allocation7 + $0x78] sm:$0xff]
    %v286 = vld [vmem:[%s6] sm:$0x1]
    %v288 = vlaneseq
    %v289 = vshrl.u32 %v288, 7
    %v290 = vsub.s32 0, %v289
    %v291 = vrot.slane %v286, %v290
    %293 = vmatprep.subr.mxu0 0.0
    %294 = vmatpush1.msra.mxu0 %v285
    %295 = vmatprep.subr.mxu0 0.0
    %296 = vmatpush1.msra.mxu0 %v284
    %297 = vmatprep.subr.mxu0 0.0
    %298 = vmatpush1.msra.mxu0 %v283
    %299 = vmatprep.subr.mxu0 0.0
    %300 = vmatpush1.msra.mxu0 %v282
    %301 = vmatprep.subr.mxu0 0.0
    %302 = vmatpush1.msra.mxu0 %v281
    %303 = vmatprep.subr.mxu0 0.0
    %304 = vmatpush1.msra.mxu0 %v280
    %305 = vmatprep.subr.mxu0 0.0
    %306 = vmatpush1.msra.mxu0 %v279
    %307 = vmatprep.subr.mxu0 0.0
    %308 = vmatpush1.msra.mxu0 %v278
    %309 = vmatprep.subr.mxu0 0.0
    %310 = vmatpush1.msra.mxu0 %v277
    %311 = vmatprep.subr.mxu0 0.0
    %312 = vmatpush1.msra.mxu0 %v276
    %313 = vmatprep.subr.mxu0 0.0
    %314 = vmatpush1.msra.mxu0 %v275
    %315 = vmatprep.subr.mxu0 0.0
    %316 = vmatpush1.msra.mxu0 %v274
    %317 = vmatprep.subr.mxu0 0.0
    %318 = vmatpush1.msra.mxu0 %v273
    %319 = vmatprep.subr.mxu0 0.0
    %320 = vmatpush1.msra.mxu0 %v272
    %321 = vmatprep.subr.mxu0 0.0
    %322 = vmatpush1.msra.mxu0 %v271
    %323 = vmatprep.subr.mxu0 0.0
    %324 = vmatpush1.msra.mxu0 %v270
    %325 = vmatprep.subr.mxu0 0.0
    %326 = vmatpush2.msra.mxu0 0.0
    %327 = vmatprep.subr.mxu0 0.0
    %328 = vmatpush2.msra.mxu0 0.0
    %329 = vmatprep.subr.mxu0 0.0
    %330 = vmatpush2.msra.mxu0 0.0
    %331 = vmatprep.subr.mxu0 0.0
    %332 = vmatpush2.msra.mxu0 0.0
    %333 = vmatprep.subr.mxu0 0.0
    %334 = vmatpush2.msra.mxu0 0.0
    %335 = vmatprep.subr.mxu0 0.0
    %336 = vmatpush2.msra.mxu0 0.0
    %337 = vmatprep.subr.mxu0 0.0
    %338 = vmatpush2.msra.mxu0 0.0
    %339 = vmatprep.subr.mxu0 0.0
    %340 = vmatpush2.msra.mxu0 0.0
    %341 = vmatprep.subr.mxu0 0.0
    %342 = vmatpush2.msra.mxu0 0.0
    %343 = vmatprep.subr.mxu0 0.0
    %344 = vmatpush2.msra.mxu0 0.0
    %345 = vmatprep.subr.mxu0 0.0
    %346 = vmatpush2.msra.mxu0 0.0
    %347 = vmatprep.subr.mxu0 0.0
    %348 = vmatpush2.msra.mxu0 0.0
    %349 = vmatprep.subr.mxu0 0.0
    %350 = vmatpush2.msra.mxu0 0.0
    %351 = vmatprep.subr.mxu0 0.0
    %352 = vmatpush2.msra.mxu0 0.0
    %353 = vmatprep.subr.mxu0 0.0
    %354 = vmatpush2.msra.mxu0 0.0
    %355 = vmatprep.subr.mxu0 0.0
    %356 = vmatpush2.msra.mxu0 0.0
    %357 = vmatprep.mubr.f32.mxu0 0.0
    %358 = vmatmul.mubr.f32.gmra.mxu0 %v269
    %v359 = vpop.f32.mrf.mxu0
    %v360 = vadd.f32 %v291, %v359
    %v361 = vpop.f32.mrf.mxu0
    %362 = vdwg.mxu0
    %vm363 = vcmask 23552
    %364 = vst.msk [vmem:[%s7] sm:$0xff] %vm363, %v360
    // Predicated region
    $region42: #{tpu_custom_call.1} parent=1 // pred_check
      _
    $region43: #{tpu_custom_call.1} parent=1 // pred_check_branch
      %366 = sbr.rel (0) target = $region45
    $region44: #{tpu_custom_call.1} parent=1 // pred_region
      _
    $region45: #{tpu_custom_call.1} parent=1 // pred_fallthru
      _
    // Predicated region
    $region46: #{tpu_custom_call.1} parent=1 // pred_check
      _
    $region47: #{tpu_custom_call.1} parent=1 // pred_check_branch
      %368 = sbr.rel (0) target = $region49
    $region48: #{tpu_custom_call.1} parent=1 // pred_region
      _
    $region49: #{tpu_custom_call.1} parent=1 // pred_fallthru
      _
    %369 = vsyncpa [#allocation4], 1
    %370 = vsyncpa [#allocation6], 1

</llo_original>
